<compile_context>
chip_gen: v6e
topology: v6e:2x2x1
jax: 0.10.0
libtpu: 0.0.40
codegen_flags: <defaults>
</compile_context>

<pallas_src>
import functools

import jax
import jax.numpy as jnp
from jax import lax
from jax.experimental import pallas as pl
from jax.experimental.pallas import tpu as pltpu


def _round_up(x, m):
    return ((x + m - 1) // m) * m


def _focal_loss_kernel(pred_ref, target_ref, alpha_ref, out_ref, acc_ref, *,
                       gamma, use_alpha, hw_total, tile_hw):
    # pred_ref:   (1, C, TILE_HW) logits (input dtype; upcast here)
    # target_ref: (1, 1, TILE_HW) int32 class indices
    # alpha_ref:  (C, 1) float32 per-class weights (ignored if use_alpha=False)
    # out_ref:    (1, 1, TILE_HW) float32 per-(N, lane) partial sums
    # acc_ref:    (1, TILE_HW) float32 scratch accumulator (per-N, across tiles)
    t = pl.program_id(1)

    @pl.when(t == 0)
    def _():
        acc_ref[...] = jnp.zeros_like(acc_ref)

    x = pred_ref[0].astype(jnp.float32)                 # (C, TILE)
    tgt = target_ref[0]                                 # (1, TILE) int32

    # log_softmax over the class (sublane) axis, numerically stable.
    m = jnp.max(x, axis=0, keepdims=True)               # (1, TILE)
    shifted = x - m                                     # (C, TILE)
    lse = jnp.log(jnp.sum(jnp.exp(shifted), axis=0, keepdims=True))

    # gather(1, target) via a sublane one-hot (no per-element gather on TPU).
    row = lax.broadcasted_iota(jnp.int32, shifted.shape, 0)
    onehot = row == tgt                                 # (C, TILE) bool

    # logpt = shifted[target] - lse  (logp never materialized)
    s_sel = jnp.sum(jnp.where(onehot, shifted, 0.0), axis=0, keepdims=True)
    logpt = s_sel - lse                                 # (1, TILE)
    pt = jnp.exp(logpt)                                 # (1, TILE)

    if use_alpha:
        at = jnp.sum(jnp.where(onehot, alpha_ref[...], 0.0),
                     axis=0, keepdims=True)             # (1, TILE)
        logpt = logpt * at

    g = float(gamma)
    if g == 0.0:
        loss = -logpt
    else:
        omp = jnp.maximum(1.0 - pt, 0.0)                # clamp rounding ulp
        if g.is_integer() and 1 <= int(g) <= 8:
            f = omp
            for _ in range(int(g) - 1):                 # VPU multiplies, no EUP pow
                f = f * omp
        else:
            f = jnp.power(omp, jnp.float32(g))
        loss = -f * logpt                               # (1, TILE)

    # mask out padded lanes of a ragged last tile
    col = t * tile_hw + lax.broadcasted_iota(jnp.int32, (1, tile_hw), 1)
    loss = jnp.where(col < hw_total, loss, 0.0)

    acc_ref[...] += loss

    @pl.when(t == pl.num_programs(1) - 1)
    def _():
        out_ref[0] = acc_ref[...]


def focal_loss(pred, target, *, gamma=0.0, alpha=None, size_average=True,
               tile_hw=None):
    """Focal loss matching the PyTorch FocalLoss.forward semantics.

    pred:   [N, C, H, W] (or [N, C, L], or 2-D [R, C]) logits (any float dtype)
    target: integer class indices with N*H*W (resp. R) total elements
    """
    pred = jnp.asarray(pred)                  # keep original dtype through DMA
    target = jnp.asarray(target, jnp.int32)

    if pred.ndim >= 3:
        n, c = pred.shape[0], pred.shape[1]
        pred3 = pred.reshape(n, c, -1)        # [N, C, H*W] — no transpose needed
    elif pred.ndim == 2:
        # [R, C] fallback: put the R samples on the lane axis.
        r, c = pred.shape
        n = 1
        pred3 = jnp.transpose(pred, (1, 0))[None]      # [1, C, R]
    else:
        raise ValueError("pred must be at least 2-D")
    hw = pred3.shape[2]
    target3 = target.reshape(n, 1, hw)

    use_alpha = alpha is not None
    if use_alpha:
        if isinstance(alpha, (float, int)) and not isinstance(alpha, bool):
            if c != 2:
                raise ValueError("scalar alpha requires C == 2 (binary case)")
            alpha_vec = jnp.asarray([alpha, 1.0 - alpha], jnp.float32)
        else:
            alpha_vec = jnp.asarray(alpha, jnp.float32).reshape(-1)
            if alpha_vec.shape[0] != c:
                raise ValueError(
                    f"len(alpha)={alpha_vec.shape[0]} must equal C={c}")
    else:
        alpha_vec = jnp.ones((c,), jnp.float32)
    alpha_col = alpha_vec.reshape(c, 1)

    if tile_hw is None:
        # Lane-dense tile; keep double-buffered pred tiles well inside scoped
        # VMEM even on v7x (64 MiB physical / 32 MiB default scoped).
        itemsize = jnp.dtype(pred3.dtype).itemsize
        budget = 4 * 1024 * 1024
        cap = max(128, (budget // max(1, c * itemsize)) // 128 * 128)
        tile_hw = min(_round_up(hw, 128), cap, 2048)
    assert tile_hw % 128 == 0
    num_tiles = -(-hw // tile_hw)

    kernel = functools.partial(
        _focal_loss_kernel,
        gamma=float(gamma),
        use_alpha=use_alpha,
        hw_total=hw,
        tile_hw=tile_hw,
    )

    partials = pl.pallas_call(
        kernel,
        out_shape=jax.ShapeDtypeStruct((n, 1, tile_hw), jnp.float32),
        grid=(n, num_tiles),
        in_specs=[
            pl.BlockSpec((1, c, tile_hw), lambda i, t: (i, 0, t)),   # logits
            pl.BlockSpec((1, 1, tile_hw), lambda i, t: (i, 0, t)),   # targets
            pl.BlockSpec((c, 1), lambda i, t: (0, 0)),               # alpha
        ],
        out_specs=pl.BlockSpec((1, 1, tile_hw), lambda i, t: (i, 0, 0)),
        scratch_shapes=[pltpu.VMEM((1, tile_hw), jnp.float32)],
        compiler_params=pltpu.CompilerParams(
            dimension_semantics=("parallel", "arbitrary")),
    )(pred3, target3, alpha_col)

    total = jnp.sum(partials)
    if size_average:
        total = total / jnp.float32(n * hw)
    return total


def _focal_loss_ref(pred, target, *, gamma=0.0, alpha=None, size_average=True):
    """Pure-JAX reference mirroring the PyTorch code."""
    pred = jnp.asarray(pred, jnp.float32)
    if pred.ndim > 2:
        n, c = pred.shape[0], pred.shape[1]
        pred = jnp.transpose(pred.reshape(n, c, -1), (0, 2, 1)).reshape(-1, c)
    target = jnp.asarray(target, jnp.int32).reshape(-1)
    logp = jax.nn.log_softmax(pred, axis=1)
    logpt = jnp.take_along_axis(logp, target[:, None], axis=1)[:, 0]
    pt = jnp.exp(logpt)
    if alpha is not None:
        if isinstance(alpha, (float, int)) and not isinstance(alpha, bool):
            avec = jnp.asarray([alpha, 1.0 - alpha], jnp.float32)
        else:
            avec = jnp.asarray(alpha, jnp.float32)
        logpt = logpt * avec[target]
    loss = -((1.0 - pt) ** gamma) * logpt
    return loss.mean() if size_average else loss.sum()


if __name__ == "__main__":
    key = jax.random.PRNGKey(0)
    k1, k2 = jax.random.split(key)

    N, C, H, W = 2, 4, 16, 16
    pred = jax.random.normal(k1, (N, C, H, W), dtype=jnp.float32)
    target = jax.random.randint(k2, (N, H, W), 0, C, dtype=jnp.int32)

    # gamma=2 + per-class alpha + mean; tile_hw=128 forces a 2-tile HW sweep
    # (exercises the accumulator / pipelined grid).
    loss = focal_loss(pred, target, gamma=2.0, alpha=[0.25, 0.5, 0.75, 1.0],
                      size_average=True, tile_hw=128)
    loss = jax.block_until_ready(loss)
    ref = _focal_loss_ref(pred, target, gamma=2.0, alpha=[0.25, 0.5, 0.75, 1.0],
                          size_average=True)
    assert jnp.allclose(loss, ref, rtol=1e-5, atol=1e-6), (loss, ref)

    # gamma=0 / no alpha / sum reduction path (single HW tile via default tiling).
    loss2 = focal_loss(pred, target, gamma=0.0, alpha=None, size_average=False)
    loss2 = jax.block_until_ready(loss2)
    ref2 = _focal_loss_ref(pred, target, gamma=0.0, alpha=None,
                           size_average=False)
    assert jnp.allclose(loss2, ref2, rtol=1e-5, atol=1e-4), (loss2, ref2)

    print("KERNEL_OK")
</pallas_src>

<mosaic_0001>
module attributes {stable_mosaic.version = 11 : i64} {
  func.func @_focal_loss_kernel(%arg0: i32, %arg1: i32, %arg2: memref<1x4x128xf32, #tpu.memory_space<vmem>>, %arg3: memref<1x1x128xi32, #tpu.memory_space<vmem>>, %arg4: memref<4x1xf32, #tpu.memory_space<vmem>>, %arg5: memref<1x1x128xf32, #tpu.memory_space<vmem>>, %arg6: memref<1x128xf32, #tpu.memory_space<vmem>>) attributes {dimension_semantics = [#tpu.dimension_semantics<parallel>, #tpu.dimension_semantics<arbitrary>], iteration_bounds = array<i64: 2, 2>, scalar_prefetch = 0 : i64, scratch_operands = 1 : i64, tpu.core_type = #tpu.core_type<tc>, window_params = [{transform_indices = @transform_0, window_bounds = array<i64: 1, 4, 128>}, {transform_indices = @transform_1, window_bounds = array<i64: 1, 1, 128>}, {pipeline_mode = #tpu.pipeline_mode<synchronous>, transform_indices = @transform_2, window_bounds = array<i64: 4, 1>}, {transform_indices = @transform_3, window_bounds = array<i64: 1, 1, 128>}]} {
    %c0_i32 = arith.constant 0 : i32
    %0 = arith.cmpi eq, %arg1, %c0_i32 : i32
    %1 = arith.extui %0 : i1 to i32
    %c0_i32_0 = arith.constant 0 : i32
    %2 = arith.cmpi ne, %1, %c0_i32_0 : i32
    scf.if %2 {
      %cst_22 = arith.constant 0.000000e+00 : f32
      %54 = vector.broadcast %cst_22 : f32 to vector<1x128xf32>
      %c0_23 = arith.constant 0 : index
      %c0_24 = arith.constant 0 : index
      %55 = vector.load %arg6[%c0_23, %c0_24] : memref<1x128xf32, #tpu.memory_space<vmem>>, vector<1x128xf32>
      tpu.vector_store %arg6[%c0_23, %c0_24], %54 {strides = array<i32>} : memref<1x128xf32, #tpu.memory_space<vmem>>, vector<1x128xf32>,
    } else {
    }
    %c0 = arith.constant 0 : index
    %c0_1 = arith.constant 0 : index
    %c0_2 = arith.constant 0 : index
    %3 = vector.load %arg2[%c0, %c0_1, %c0_2] : memref<1x4x128xf32, #tpu.memory_space<vmem>>, vector<1x4x128xf32>
    %4 = vector.shape_cast %3 : vector<1x4x128xf32> to vector<4x128xf32>
    %c0_3 = arith.constant 0 : index
    %c0_4 = arith.constant 0 : index
    %c0_5 = arith.constant 0 : index
    %5 = vector.load %arg3[%c0_3, %c0_4, %c0_5] : memref<1x1x128xi32, #tpu.memory_space<vmem>>, vector<1x1x128xi32>
    %6 = vector.shape_cast %5 : vector<1x1x128xi32> to vector<1x128xi32>
    %cst = arith.constant dense<0xFF800000> : vector<128xf32>
    %7 = vector.multi_reduction <maximumf>, %4, %cst [0] : vector<4x128xf32> to vector<128xf32>
    %8 = vector.shape_cast %7 : vector<128xf32> to vector<1x128xf32>
    %9 = vector.broadcast %8 : vector<1x128xf32> to vector<4x128xf32>
    %10 = arith.subf %4, %9 : vector<4x128xf32>
    %11 = math.exp %10 : vector<4x128xf32>
    %cst_6 = arith.constant dense<0.000000e+00> : vector<128xf32>
    %12 = vector.multi_reduction <add>, %11, %cst_6 [0] : vector<4x128xf32> to vector<128xf32>
    %13 = vector.shape_cast %12 : vector<128xf32> to vector<1x128xf32>
    %14 = math.log %13 : vector<1x128xf32>
    %15 = tpu.iota {dimensions = array<i32: 0>} : vector<4x128xi32>
    %16 = vector.broadcast %6 : vector<1x128xi32> to vector<4x128xi32>
    %17 = arith.cmpi eq, %15, %16 : vector<4x128xi32>
    %cst_7 = arith.constant 0.000000e+00 : f32
    %18 = vector.broadcast %cst_7 : f32 to vector<4x128xf32>
    %19 = arith.select %17, %10, %18 : vector<4x128xi1>, vector<4x128xf32>
    %cst_8 = arith.constant dense<0.000000e+00> : vector<128xf32>
    %20 = vector.multi_reduction <add>, %19, %cst_8 [0] : vector<4x128xf32> to vector<128xf32>
    %21 = vector.shape_cast %20 : vector<128xf32> to vector<1x128xf32>
    %22 = arith.subf %21, %14 : vector<1x128xf32>
    %23 = math.exp %22 : vector<1x128xf32>
    %c0_9 = arith.constant 0 : index
    %c0_10 = arith.constant 0 : index
    %24 = vector.load %arg4[%c0_9, %c0_10] : memref<4x1xf32, #tpu.memory_space<vmem>>, vector<4x1xf32>
    %cst_11 = arith.constant 0.000000e+00 : f32
    %25 = vector.shape_cast %24 : vector<4x1xf32> to vector<4x1xf32>
    %26 = vector.broadcast %25 : vector<4x1xf32> to vector<4x128xf32>
    %27 = vector.broadcast %cst_11 : f32 to vector<4x128xf32>
    %28 = arith.select %17, %26, %27 : vector<4x128xi1>, vector<4x128xf32>
    %cst_12 = arith.constant dense<0.000000e+00> : vector<128xf32>
    %29 = vector.multi_reduction <add>, %28, %cst_12 [0] : vector<4x128xf32> to vector<128xf32>
    %30 = vector.shape_cast %29 : vector<128xf32> to vector<1x128xf32>
    %31 = arith.mulf %22, %30 : vector<1x128xf32>
    %cst_13 = arith.constant 1.000000e+00 : f32
    %32 = vector.broadcast %cst_13 : f32 to vector<1x128xf32>
    %33 = arith.subf %32, %23 : vector<1x128xf32>
    %cst_14 = arith.constant 0.000000e+00 : f32
    %34 = vector.broadcast %cst_14 : f32 to vector<1x128xf32>
    %35 = arith.maximumf %33, %34 : vector<1x128xf32>
    %36 = arith.mulf %35, %35 : vector<1x128xf32>
    %cst_15 = arith.constant 0.000000e+00 : f32
    %37 = vector.broadcast %cst_15 : f32 to vector<1x128xf32>
    %38 = arith.subf %37, %36 : vector<1x128xf32>
    %39 = arith.mulf %38, %31 : vector<1x128xf32>
    %c128_i32 = arith.constant 128 : i32
    %40 = arith.muli %arg1, %c128_i32 : i32
    %41 = tpu.iota {dimensions = array<i32: 1>} : vector<1x128xi32>
    %42 = vector.broadcast %40 : i32 to vector<1x128xi32>
    %43 = arith.addi %42, %41 : vector<1x128xi32>
    %c256_i32 = arith.constant 256 : i32
    %44 = vector.broadcast %c256_i32 : i32 to vector<1x128xi32>
    %45 = arith.cmpi slt, %43, %44 : vector<1x128xi32>
    %cst_16 = arith.constant 0.000000e+00 : f32
    %46 = vector.broadcast %cst_16 : f32 to vector<1x128xf32>
    %47 = arith.select %45, %39, %46 : vector<1x128xi1>, vector<1x128xf32>
    %c0_17 = arith.constant 0 : index
    %c0_18 = arith.constant 0 : index
    %48 = vector.load %arg6[%c0_17, %c0_18] : memref<1x128xf32, #tpu.memory_space<vmem>>, vector<1x128xf32>
    %49 = arith.addf %48, %47 : vector<1x128xf32>
    %c0_19 = arith.constant 0 : index
    %c0_20 = arith.constant 0 : index
    %50 = vector.load %arg6[%c0_19, %c0_20] : memref<1x128xf32, #tpu.memory_space<vmem>>, vector<1x128xf32>
    tpu.vector_store %arg6[%c0_19, %c0_20], %49 {strides = array<i32>} : memref<1x128xf32, #tpu.memory_space<vmem>>, vector<1x128xf32>,
    %c1_i32 = arith.constant 1 : i32
    %51 = arith.cmpi eq, %arg1, %c1_i32 : i32
    %52 = arith.extui %51 : i1 to i32
    %c0_i32_21 = arith.constant 0 : i32
    %53 = arith.cmpi ne, %52, %c0_i32_21 : i32
    scf.if %53 {
      %c0_22 = arith.constant 0 : index
      %c0_23 = arith.constant 0 : index
      %54 = vector.load %arg6[%c0_22, %c0_23] : memref<1x128xf32, #tpu.memory_space<vmem>>, vector<1x128xf32>
      %c0_24 = arith.constant 0 : index
      %c0_25 = arith.constant 0 : index
      %c0_26 = arith.constant 0 : index
      %55 = vector.load %arg5[%c0_24, %c0_25, %c0_26] : memref<1x1x128xf32, #tpu.memory_space<vmem>>, vector<1x1x128xf32>
      %56 = vector.shape_cast %55 : vector<1x1x128xf32> to vector<1x128xf32>
      %57 = vector.shape_cast %54 : vector<1x128xf32> to vector<1x1x128xf32>
      tpu.vector_store %arg5[%c0_24, %c0_25, %c0_26], %57 {strides = array<i32>} : memref<1x1x128xf32, #tpu.memory_space<vmem>>, vector<1x1x128xf32>,
    } else {
    }
    return
  }
  func.func @transform_0(%arg0: i32, %arg1: i32) -> (i32, i32, i32) {
    %c0_i32 = arith.constant 0 : i32
    %c0_i32_0 = arith.constant 0 : i32
    return %arg0, %c0_i32, %arg1 : i32, i32, i32
  }
  func.func @transform_1(%arg0: i32, %arg1: i32) -> (i32, i32, i32) {
    %c0_i32 = arith.constant 0 : i32
    %c0_i32_0 = arith.constant 0 : i32
    return %arg0, %c0_i32, %arg1 : i32, i32, i32
  }
  func.func @transform_2(%arg0: i32, %arg1: i32) -> (i32, i32) {
    %c0_i32 = arith.constant 0 : i32
    %c0_i32_0 = arith.constant 0 : i32
    %c0_i32_1 = arith.constant 0 : i32
    return %c0_i32, %c0_i32_0 : i32, i32
  }
  func.func @transform_3(%arg0: i32, %arg1: i32) -> (i32, i32, i32) {
    %c0_i32 = arith.constant 0 : i32
    %c0_i32_0 = arith.constant 0 : i32
    %c0_i32_1 = arith.constant 0 : i32
    return %arg0, %c0_i32, %c0_i32_0 : i32, i32, i32
  }
}

</mosaic_0001>

<llo_original>
// kernel: tpu_custom_call.1
$region0: #{tpu_custom_call.1}
  #allocation0 [shape = 'u32[]', space=smem, size = 0x4, offset = 0x4, fixed_abs, tag = 'smem constant byte address 0x4 - core index']
  #allocation1 [shape = 'u32[144,128]{1,0:T(1,128)}', space=vmem, size = 0x12000, scoped, tag = 'internal scratch']
  #allocation2 [shape = 'f32[1,128]{1,0:T(1,128)}', space=vmem, size = 0x200, scoped, tag = 'scratch operand']
  %s0 = inlined_call_operand.hbm [shape: f32[2,4,256], index: 0, kind: input, shape index: {}]
  %s1 = inlined_call_operand.vmem [shape: s32[2,1,256], index: 1, kind: input, shape index: {}]
  %s2 = inlined_call_operand.vmem [shape: f32[4,1], index: 2, kind: input, shape index: {}]
  %s3 = inlined_call_operand.hbm [shape: f32[2,1,128], index: 3, kind: output, shape index: {}]
  %s4 = sld [smem:[#allocation0]]
  $region57: #{tpu_custom_call.1} parent=0
    _
  %s6 = ssub.s32 1, %s4
  %s7 = scalar_select 0, %s6, %s4
  $region1: #{tpu_custom_call.1} parent=0
    #allocation3 [shape = 'u8[4096]{0}', space=vmem, size = 0x1000, scoped, tag = 'input window, operand 0']
    #allocation4 [shape = 's32[2]{0}', space=sflag, size = 0x8, scoped, tag = 'scoped memory for tpu_custom_call.1']
    #allocation5 [shape = 's32[2]{0}', space=sflag, size = 0x8, scoped, tag = 'scoped memory for tpu_custom_call.1']
    #allocation6 [shape = 'u8[1024]{0}', space=vmem, size = 0x400, scoped, tag = 'output window, operand 0']
    %8 = vsyncpa [#allocation4], 0
    %s9 = scalar_lea.sflag [#allocation4], 1
    %10 = vsyncpa %s9, 0
    %11 = vsyncpa [#allocation5], 0
    %s12 = scalar_lea.sflag [#allocation5], 1
    %13 = vsyncpa %s12, 0
    loop: start=0, step=1, limit=6
    $region2: #{tpu_custom_call.1} parent=1 // loop_pre_header
      _
    $region3: #{tpu_custom_call.1} parent=1 // loop_header
      %s15 = sphi 0, %s19
      %p16 = scmp.ge.s32.totalorder %s15, 6
      %s22 = sphi 0, %s34
      %s23 = sphi 0, %s30
      %s24 = sphi 0, %s22
      %s25 = sphi 0, %s23
      %s26 = sphi 0, %s24
      %s27 = sphi 0, %s25
      %s39 = sphi 0, %s41
      %s42 = sphi 0, %s39
      %s43 = sphi 0, %s42
      %s59 = sphi 0, %s43
      %s67 = sphi 0, %s69
      %s70 = sphi 0, %s67
      %s71 = sphi 0, %s70
      %s87 = sphi 0, %s71
      %s91 = sphi 0, %s91
      %s93 = sphi 0, %s91
      %s94 = sphi 0, %s93
      %s108 = sphi 0, %s94
      %s114 = sphi 0, %s116
      %s117 = sphi 0, %s114
      %s118 = sphi 0, %s117
      %s134 = sphi 0, %s118
    $region4: #{tpu_custom_call.1} parent=1 // loop_header_branch
      %18 = sbr.rel (%p16) target = $region8
    $region5: #{tpu_custom_call.1} parent=1 // loop_body
      %s20 = ssub.s32 %s15, 1
      %s21 = ssub.s32 %s15, 2
      %s28 = sadd.s32 1, %s23
      %p29 = scmp.ge.s32.totalorder %s28, 2
      %s30 = scalar_select %p29, 0, %s28
      %s31 = sadd.s32 1, %s22
      %s32 = scalar_select %p29, %s31, %s22
      %p33 = scmp.ge.s32.totalorder %s32, 2
      %s34 = scalar_select %p33, 0, %s32
      %s35 = ssub.s32 %s22, %s34
      %s36 = ssub.s32 %s23, %s30
      %s37 = sor.u32 %s35, %s36
      %p38 = scmp.eq.s32.totalorder %s37, 0
      %s40 = sadd.s32 %s39, 1
      %s41 = scalar_select %p38, %s39, %s40
      %p44 = pneg %p38
      %p45 = scmp.eq.s32.totalorder %s15, 3
      %p46 = por %p44, %p45
      %p47 = scmp.ne.s32.totalorder %s39, %s42
      %p48 = scmp.eq.s32.totalorder %s15, 0
      %p49 = por %p47, %p48
      %p50 = scmp.ne.s32.totalorder %s39, %s42
      %p51 = scmp.eq.s32.totalorder %s20, 3
      %p52 = por %p50, %p51
      %p53 = scmp.ne.s32.totalorder %s42, %s43
      %p54 = scmp.eq.s32.totalorder %s20, 0
      %p55 = por %p53, %p54
      %p56 = scmp.ne.s32.totalorder %s42, %s43
      %p57 = scmp.eq.s32.totalorder %s21, 3
      %p58 = por %p56, %p57
      %p60 = scmp.ne.s32.totalorder %s43, %s59
      %p61 = scmp.eq.s32.totalorder %s21, 0
      %p62 = por %p60, %p61
      %s63 = ssub.s32 %s22, %s34
      %s64 = ssub.s32 %s23, %s30
      %s65 = sor.u32 %s63, %s64
      %p66 = scmp.eq.s32.totalorder %s65, 0
      %s68 = sadd.s32 %s67, 1
      %s69 = scalar_select %p66, %s67, %s68
      %p72 = pneg %p66
      %p73 = scmp.eq.s32.totalorder %s15, 3
      %p74 = por %p72, %p73
      %p75 = scmp.ne.s32.totalorder %s67, %s70
      %p76 = scmp.eq.s32.totalorder %s15, 0
      %p77 = por %p75, %p76
      %p78 = scmp.ne.s32.totalorder %s67, %s70
      %p79 = scmp.eq.s32.totalorder %s20, 3
      %p80 = por %p78, %p79
      %p81 = scmp.ne.s32.totalorder %s70, %s71
      %p82 = scmp.eq.s32.totalorder %s20, 0
      %p83 = por %p81, %p82
      %p84 = scmp.ne.s32.totalorder %s70, %s71
      %p85 = scmp.eq.s32.totalorder %s21, 3
      %p86 = por %p84, %p85
      %p88 = scmp.ne.s32.totalorder %s71, %s87
      %p89 = scmp.eq.s32.totalorder %s21, 0
      %p90 = por %p88, %p89
      %s92 = sadd.s32 %s91, 1
      %p95 = scmp.eq.s32.totalorder %s15, 3
      %p96 = scmp.ne.s32.totalorder %s91, %s93
      %p97 = scmp.eq.s32.totalorder %s15, 0
      %p98 = por %p96, %p97
      %p99 = scmp.ne.s32.totalorder %s91, %s93
      %p100 = scmp.eq.s32.totalorder %s20, 3
      %p101 = por %p99, %p100
      %p102 = scmp.ne.s32.totalorder %s93, %s94
      %p103 = scmp.eq.s32.totalorder %s20, 0
      %p104 = por %p102, %p103
      %p105 = scmp.ne.s32.totalorder %s93, %s94
      %p106 = scmp.eq.s32.totalorder %s21, 3
      %p107 = por %p105, %p106
      %p109 = scmp.ne.s32.totalorder %s94, %s108
      %p110 = scmp.eq.s32.totalorder %s21, 0
      %p111 = por %p109, %p110
      %s112 = ssub.s32 %s22, %s34
      %p113 = scmp.eq.s32.totalorder %s112, 0
      %s115 = sadd.s32 %s114, 1
      %s116 = scalar_select %p113, %s114, %s115
      %p119 = pneg %p113
      %p120 = scmp.eq.s32.totalorder %s15, 3
      %p121 = por %p119, %p120
      %p122 = scmp.ne.s32.totalorder %s114, %s117
      %p123 = scmp.eq.s32.totalorder %s15, 0
      %p124 = por %p122, %p123
      %p125 = scmp.ne.s32.totalorder %s114, %s117
      %p126 = scmp.eq.s32.totalorder %s20, 3
      %p127 = por %p125, %p126
      %p128 = scmp.ne.s32.totalorder %s117, %s118
      %p129 = scmp.eq.s32.totalorder %s20, 0
      %p130 = por %p128, %p129
      %p131 = scmp.ne.s32.totalorder %s117, %s118
      %p132 = scmp.eq.s32.totalorder %s21, 3
      %p133 = por %p131, %p132
      %p135 = scmp.ne.s32.totalorder %s118, %s134
      %p136 = scmp.eq.s32.totalorder %s21, 0
      %p137 = por %p135, %p136
      %p138 = scmp.le.s32.totalorder 1, %s15
      %p139 = scmp.lt.s32.totalorder %s15, 5
      %p140 = pnand %p138, %p139
      %p141 = pneg %p140
      // Predicated region
      $region9: #{tpu_custom_call.1} parent=5 // pred_check
        _
      $region10: #{tpu_custom_call.1} parent=5 // pred_check_branch
        %143 = sbr.rel (%p140) target = $region12
      $region11: #{tpu_custom_call.1} parent=5 // pred_region
        %s144 = ssub.s32 %s15, 1
        // Predicated region
        $region13: #{tpu_custom_call.1} parent=11 // pred_check
          %p145 = pneg %p104
        $region14: #{tpu_custom_call.1} parent=11 // pred_check_branch
          %147 = sbr.rel (%p145) target = $region16
        $region15: #{tpu_custom_call.1} parent=11 // pred_region
          _
        $region16: #{tpu_custom_call.1} parent=11 // pred_fallthru
          _
      $region12: #{tpu_custom_call.1} parent=5 // pred_fallthru
        _
      %p148 = scmp.lt.s32.totalorder %s15, 4
      // Predicated region
      $region17: #{tpu_custom_call.1} parent=5 // pred_check
        %p149 = pneg %p148
      $region18: #{tpu_custom_call.1} parent=5 // pred_check_branch
        %151 = sbr.rel (%p149) target = $region20
      $region19: #{tpu_custom_call.1} parent=5 // pred_region
        // Predicated region
        $region21: #{tpu_custom_call.1} parent=19 // pred_check
          %p152 = pneg %p49
        $region22: #{tpu_custom_call.1} parent=19 // pred_check_branch
          %154 = sbr.rel (%p152) target = $region24
        $region23: #{tpu_custom_call.1} parent=19 // pred_region
          %s155 = sand.u32 %s39, 1
          %s156 = scalar_lea.sflag [#allocation4], %s155
          %s157 = sand.u32 %s39, 1
          %s158 = smul.addr %s157, 4
          %s159 = scalar_lea.vmem [#allocation3], %s158
          %s161 = ssub.s32 64, 64
          %162 = vsyncadd %s156, %s161
          %s163 = smul.addr %s22, 2
          %s164 = sadd.s32 %s23, %s163
          %s165 = smul.addr %s164, 64
          %s166 = scalar_lea.hbm %s0, %s165
          %s168 = sshll.u32 %s159, 4
          %s169 = int_to_ptr.vmem [resolvable:$true] %s168
          %171 = dma.hbm_to_vmem [thread:$0]  %s166, 64, %s169, %s156
        $region24: #{tpu_custom_call.1} parent=19 // pred_fallthru
          _
        // Predicated region
        $region25: #{tpu_custom_call.1} parent=19 // pred_check
          %p172 = pneg %p77
        $region26: #{tpu_custom_call.1} parent=19 // pred_check_branch
          %174 = sbr.rel (%p172) target = $region28
        $region27: #{tpu_custom_call.1} parent=19 // pred_region
          %p175 = scmp.lt.s32.totalorder %s22, 1
          %s176 = scalar_select %p175, %s22, 1
          %p177 = scmp.lt.s32.totalorder %s23, 1
          %s178 = scalar_select %p177, %s23, 1
          %s179 = smul.addr %s176, 2
          %s180 = sadd.s32 %s178, %s179
          %s181 = scalar_lea.vmem %s1, %s180
        $region28: #{tpu_custom_call.1} parent=19 // pred_fallthru
          _
      $region20: #{tpu_custom_call.1} parent=5 // pred_fallthru
        _
      %p182 = scmp.le.s32.totalorder 1, %s15
      %p183 = scmp.lt.s32.totalorder %s15, 5
      %p184 = pnand %p182, %p183
      %p185 = pneg %p184
      // Predicated region
      $region29: #{tpu_custom_call.1} parent=5 // pred_check
        _
      $region30: #{tpu_custom_call.1} parent=5 // pred_check_branch
        %187 = sbr.rel (%p184) target = $region32
      $region31: #{tpu_custom_call.1} parent=5 // pred_region
        %s188 = ssub.s32 %s15, 1
        %s189 = sand.u32 %s42, 1
        %s190 = scalar_lea.sflag [#allocation4], %s189
        %s191 = sand.u32 %s42, 1
        %s192 = smul.addr %s191, 4
        %s193 = scalar_lea.vmem [#allocation3], %s192
        // Predicated region
        $region33: #{tpu_custom_call.1} parent=31 // pred_check
          %p194 = pneg %p55
        $region34: #{tpu_custom_call.1} parent=31 // pred_check_branch
          %196 = sbr.rel (%p194) target = $region36
        $region35: #{tpu_custom_call.1} parent=31 // pred_region
          %197 = dma.done %s190, 64
        $region36: #{tpu_custom_call.1} parent=31 // pred_fallthru
          _
        %s198 = sand.u32 %s42, 1
        %s199 = scalar_lea.sflag [#allocation4], %s198
        %s200 = sand.u32 %s42, 1
        %s201 = smul.addr %s200, 4
        %s202 = scalar_lea.vmem [#allocation3], %s201
        %p203 = pneg %p55
        %p204 = pneg %p52
        %p205 = scmp.lt.s32.totalorder %s24, 1
        %s206 = scalar_select %p205, %s24, 1
        %p207 = scmp.lt.s32.totalorder %s25, 1
        %s208 = scalar_select %p207, %s25, 1
        %s209 = smul.addr %s206, 2
        %s210 = sadd.s32 %s208, %s209
        %s211 = scalar_lea.vmem %s1, %s210
        %p212 = pneg %p83
        %p213 = pneg %p80
        %p214 = pneg %p104
        %p215 = pneg %p101
        %p216 = pneg %p130
        %p217 = pneg %p127
        %s218 = sand.u32 %s117, 1
        %s219 = scalar_lea.sflag [#allocation5], %s218
        %s220 = sand.u32 %s117, 1
        %s221 = scalar_lea.vmem [#allocation6], %s220
        %p222 = scmp.lt.s32.totalorder %s24, 1
        %s223 = scalar_select %p222, %s24, 1
        %p224 = scmp.lt.s32.totalorder %s25, 1
        %s225 = scalar_select %p224, %s25, 1
        %s226 = smul.addr %s223, 2
        %s227 = sadd.s32 %s225, %s226
        %s228 = scalar_lea.vmem %s1, %s227
        %p229 = scmp.eq.s32.totalorder %s25, 0
        // Predicated region
        $region37: #{tpu_custom_call.1} parent=31 // pred_check
          %p230 = pneg %p229
        $region38: #{tpu_custom_call.1} parent=31 // pred_check_branch
          %232 = sbr.rel (%p230) target = $region40
        $region39: #{tpu_custom_call.1} parent=31 // pred_region
          %233 = vst [vmem:[#allocation2] sm:$0x1] 0.0
        $region40: #{tpu_custom_call.1} parent=31 // pred_fallthru
          _
        %v234 = vld [vmem:[%s193] sm:$0xf]
        %v235 = vld [vmem:[%s228] sm:$0x1]
        %vm236 = vcmask 1043456
        %v237 = vsel %vm236, %v234, -inf
        %v238 = vrot.slane %v237, 4
        %v239 = vmax.f32 %v237, %v238
        %v240 = vrot.slane %v239, 2
        %v241 = vmax.f32 %v239, %v240
        %v242 = vrot.slane %v241, 1
        %v243 = vmax.f32 %v241, %v242
        %v244 = vsub.f32 %v234, %v243
        %v245 = vmul.f32 %v244, 1.442695
        %v246 = vpow.pop %v245
        %v247 = vsel %vm236, %v246, 0.0
        %v248 = vrot.slane %v247, 4
        %v249 = vadd.f32 %v247, %v248
        %v250 = vrot.slane %v249, 2
        %v251 = vadd.f32 %v249, %v250
        %v252 = vrot.slane %v251, 1
        %v253 = vadd.f32 %v251, %v252
        %v254 = vlog2.pop %v253
        %v255 = vmul.f32 %v254, 0.6931472
        %v256 = vlaneseq
        %v257 = vshrl.u32 %v256, 7
        %v258 = vlaneseq
        %v259 = vshrl.u32 %v258, 7
        %v260 = vsub.s32 0, %v259
        %v261 = vrot.slane %v235, %v260
        %vm262 = vcmp.eq.s32.totalorder %v257, %v261
        %v263 = vsel %vm262, %v244, 0.0
        %v264 = vsel %vm236, %v263, 0.0
        %v265 = vrot.slane %v264, 4
        %v266 = vadd.f32 %v264, %v265
        %v267 = vrot.slane %v266, 2
        %v268 = vadd.f32 %v266, %v267
        %v269 = vrot.slane %v268, 1
        %v270 = vadd.f32 %v268, %v269
        %v271 = vsub.f32 %v270, %v255
        %v272 = vmul.f32 %v271, 1.442695
        %v273 = vpow.pop %v272
        %v274 = vld [vmem:[%s2] sm:$0xf]
        %276 = vset.pattern.permute.xlu0 0
        %277 = vperm.xlu0 %276, %v274
        %v278 = vpop.permute.xlu0 %277
        %v280 = vsel %vm262, %v278, 0.0
        %v281 = vsel %vm236, %v280, 0.0
        %v282 = vrot.slane %v281, 4
        %v283 = vadd.f32 %v281, %v282
        %v284 = vrot.slane %v283, 2
        %v285 = vadd.f32 %v283, %v284
        %v286 = vrot.slane %v285, 1
        %v287 = vadd.f32 %v285, %v286
        %v288 = vmul.f32 %v271, %v287
        %v289 = vsub.f32 1.0, %v273
        %v290 = vmax.f32 %v289, 0.0
        %v291 = vmul.f32 %v290, %v290
        %v292 = vsub.f32 0.0, %v291
        %v293 = vmul.f32 %v292, %v288
        %s294 = smul.u32 %s25, 128
        %v295 = vlaneseq
        %v296 = vand.u32 %v295, 127
        %v297 = vstv %s294
        %v298 = vadd.s32 %v297, %v296
        %vm299 = vcmp.lt.s32.totalorder %v298, 256
        %v300 = vsel %vm299, %v293, 0.0
        %v301 = vld [vmem:[#allocation2] sm:$0x1]
        %v302 = vadd.f32 %v301, %v300
        %303 = vst [vmem:[#allocation2] sm:$0x1] %v302
        %p304 = scmp.eq.s32.totalorder %s25, 1
        // Predicated region
        $region41: #{tpu_custom_call.1} parent=31 // pred_check
          %p305 = pneg %p304
        $region42: #{tpu_custom_call.1} parent=31 // pred_check_branch
          %307 = sbr.rel (%p305) target = $region44
        $region43: #{tpu_custom_call.1} parent=31 // pred_region
          %v308 = vld [vmem:[#allocation2] sm:$0x1]
          %309 = vst [vmem:[%s221] sm:$0x1] %v308
        $region44: #{tpu_custom_call.1} parent=31 // pred_fallthru
          _
        %s310 = sand.u32 %s117, 1
        %s311 = scalar_lea.sflag [#allocation5], %s310
        %s312 = sand.u32 %s117, 1
        %s313 = scalar_lea.vmem [#allocation6], %s312
        // Predicated region
        $region45: #{tpu_custom_call.1} parent=31 // pred_check
          %p314 = pneg %p127
        $region46: #{tpu_custom_call.1} parent=31 // pred_check_branch
          %316 = sbr.rel (%p314) target = $region48
        $region47: #{tpu_custom_call.1} parent=31 // pred_region
          %s318 = ssub.s32 16, 16
          %319 = vsyncadd %s311, %s318
          %s320 = smul.addr %s24, 16
          %s321 = scalar_lea.hbm %s3, %s320
          %s323 = sshll.u32 %s313, 4
          %s324 = int_to_ptr.vmem [resolvable:$true] %s323
          %326 = dma.vmem_to_hbm [thread:$0]  %s324, 16, %s321, %s311
        $region48: #{tpu_custom_call.1} parent=31 // pred_fallthru
          _
      $region32: #{tpu_custom_call.1} parent=5 // pred_fallthru
        _
      %p327 = scmp.le.s32.totalorder 2, %s15
      // Predicated region
      $region49: #{tpu_custom_call.1} parent=5 // pred_check
        %p328 = pneg %p327
      $region50: #{tpu_custom_call.1} parent=5 // pred_check_branch
        %330 = sbr.rel (%p328) target = $region52
      $region51: #{tpu_custom_call.1} parent=5 // pred_region
        %s331 = ssub.s32 %s15, 2
        // Predicated region
        $region53: #{tpu_custom_call.1} parent=51 // pred_check
          %p332 = pneg %p133
        $region54: #{tpu_custom_call.1} parent=51 // pred_check_branch
          %334 = sbr.rel (%p332) target = $region56
        $region55: #{tpu_custom_call.1} parent=51 // pred_region
          %s335 = sand.u32 %s118, 1
          %s336 = scalar_lea.sflag [#allocation5], %s335
          %s337 = sand.u32 %s118, 1
          %s338 = scalar_lea.vmem [#allocation6], %s337
          %339 = dma.done %s336, 16
        $region56: #{tpu_custom_call.1} parent=51 // pred_fallthru
          _
      $region52: #{tpu_custom_call.1} parent=5 // pred_fallthru
        _
    $region6: #{tpu_custom_call.1} parent=1 // loop_footer
      %s19 = sadd.s32 1, %s15
    $region7: #{tpu_custom_call.1} parent=1 // loop_footer_branch
      %14 = sbr.rel target = $region3
    $region8: #{tpu_custom_call.1} parent=1 // loop_exit
      _
    %340 = vsyncpa [#allocation4], 1
    %s341 = scalar_lea.sflag [#allocation4], 1
    %342 = vsyncpa %s341, 1
    %343 = vsyncpa [#allocation5], 1
    %s344 = scalar_lea.sflag [#allocation5], 1
    %345 = vsyncpa %s344, 1

</llo_original>
